<compile_context>
chip_gen: v7x
topology: tpu7x:2x2x1
jax: 0.10.0
libtpu: 0.0.40
codegen_flags: <defaults>
</compile_context>

<pallas_src>
from functools import partial

import numpy as np
import jax
import jax.numpy as jnp
from jax import lax
from jax.experimental import pallas as pl
from jax.experimental.pallas import tpu as pltpu

HISTORY_LEN = 20
HIDDEN = 64
N_ACTIONS = 4

X_PAD = 24               # HISTORY_LEN padded up to a sublane multiple (8)
OUT_COLS = 8             # packed output: cols 0..3 probs, col 4 value, rest 0

# Packed parameter slab layout (row offsets, every block 8-row aligned):
W1_OFF = 0               # rows [0, 24)    : fc1 weight (X_PAD, HIDDEN), 0.01 folded in
W2_OFF = 24              # rows [24, 88)   : fc2 weight (HIDDEN, HIDDEN)
WH_OFF = 88              # rows [88, 152)  : fused head weight (HIDDEN, HIDDEN)
BIAS_OFF = 152           # rows [152, 160) : row 0 = b1, row 1 = b2, row 2 = fused head bias
SLAB_ROWS = 160


# ----------------------------------------------------------------------------
# Deterministic parameter init (mirrors torch.nn.init.orthogonal_(w, std) and
# constant bias).  Weights stored transposed (in, out) so the kernel does x @ W.
# ----------------------------------------------------------------------------
def _orthogonal(key, out_features, in_features, std):
    rows, cols = out_features, in_features
    flat = jax.random.normal(key, (max(rows, cols), min(rows, cols)), jnp.float32)
    q, r = jnp.linalg.qr(flat)
    d = jnp.sign(jnp.diagonal(r))
    q = q * d[None, :]
    if rows < cols:
        q = q.T
    w = std * q[:rows, :cols]           # (out, in)  -- torch layout
    return w.T                          # (in, out)  -- kernel layout


def init_params(seed=0):
    keys = jax.random.split(jax.random.PRNGKey(seed), 4)
    return {
        "w1": _orthogonal(keys[0], HIDDEN, HISTORY_LEN, np.sqrt(2.0)),
        "b1": jnp.zeros((1, HIDDEN), jnp.float32),
        "w2": _orthogonal(keys[1], HIDDEN, HIDDEN, np.sqrt(2.0)),
        "b2": jnp.zeros((1, HIDDEN), jnp.float32),
        "wa": _orthogonal(keys[2], N_ACTIONS, HIDDEN, 0.01),
        "ba": jnp.zeros((1, N_ACTIONS), jnp.float32),
        "wc": _orthogonal(keys[3], 1, HIDDEN, 0.01),
        "bc": jnp.zeros((1, 1), jnp.float32),
    }


def pack_params(p):
    """Pack all weights/biases into a single (SLAB_ROWS, HIDDEN) f32 slab.

    The 1/100 input scale is folded into w1 here (one-time, host-side).
    """
    slab = jnp.zeros((SLAB_ROWS, HIDDEN), jnp.float32)
    slab = slab.at[W1_OFF:W1_OFF + HISTORY_LEN, :].set(0.01 * p["w1"])
    slab = slab.at[W2_OFF:W2_OFF + HIDDEN, :].set(p["w2"])
    # Fused head weight: cols 0..3 = actor, col 4 = critic, rest zero.
    wh = jnp.zeros((HIDDEN, HIDDEN), jnp.float32)
    wh = wh.at[:, :N_ACTIONS].set(p["wa"])
    wh = wh.at[:, N_ACTIONS:N_ACTIONS + 1].set(p["wc"])
    slab = slab.at[WH_OFF:WH_OFF + HIDDEN, :].set(wh)
    slab = slab.at[BIAS_OFF + 0, :].set(p["b1"][0])
    slab = slab.at[BIAS_OFF + 1, :].set(p["b2"][0])
    bh = jnp.zeros((HIDDEN,), jnp.float32)
    bh = bh.at[:N_ACTIONS].set(p["ba"][0])
    bh = bh.at[N_ACTIONS].set(p["bc"][0, 0])
    slab = slab.at[BIAS_OFF + 2, :].set(bh)
    return slab


# ----------------------------------------------------------------------------
# Pallas kernel: one batch tile of the whole forward (3 matmuls, tanh x2,
# masked softmax).  x arrives pre-padded to X_PAD columns; the 0.01 scale is
# already folded into w1.
# ----------------------------------------------------------------------------
def actor_critic_kernel(x_ref, slab_ref, out_ref):
    x = x_ref[...]

    # One aligned 8-row load covers all three bias rows.
    biases = slab_ref[BIAS_OFF:BIAS_OFF + 8, :]
    b1 = biases[0:1, :]
    b2 = biases[1:2, :]
    bh = biases[2:3, :]

    w1 = slab_ref[W1_OFF:W1_OFF + X_PAD, :]          # sublane-aligned (24 rows)
    h1 = jnp.tanh(jnp.dot(x, w1, preferred_element_type=jnp.float32) + b1)

    w2 = slab_ref[W2_OFF:W2_OFF + HIDDEN, :]
    h2 = jnp.tanh(jnp.dot(h1, w2, preferred_element_type=jnp.float32) + b2)

    # Fused actor + critic head: one matmul -> (TB, HIDDEN);
    # cols 0..3 are actor logits, col 4 is the critic value, rest are zero.
    wh = slab_ref[WH_OFF:WH_OFF + HIDDEN, :]
    heads = jnp.dot(h2, wh, preferred_element_type=jnp.float32) + bh

    # Softmax restricted to the N_ACTIONS logit columns; pass value through.
    col = lax.broadcasted_iota(jnp.int32, heads.shape, 1)
    is_logit = col < N_ACTIONS
    masked = jnp.where(is_logit, heads, jnp.float32(-jnp.inf))
    m = jnp.max(masked, axis=-1, keepdims=True)
    e = jnp.exp(masked - m)                           # exp(-inf) == 0 off-logit
    s = jnp.sum(e, axis=-1, keepdims=True)
    probs = e * pl.reciprocal(s, approx=False)

    # Packed store: probs in cols 0..3, value in col 4, only low 8 lanes kept.
    out_ref[...] = jnp.where(is_logit, probs, heads)[:, :OUT_COLS]


@partial(jax.jit, static_argnames=("batch_tile",))
def actor_critic_forward(x, slab, *, batch_tile=1024):
    B = x.shape[0]

    # Pad the feature dim to the aligned contraction width (zeros x zero w1 rows).
    x = jnp.pad(x, ((0, 0), (0, X_PAD - HISTORY_LEN)))

    # Batch tile: multiple of 8, no larger than the (rounded-up) batch.
    TB = min(batch_tile, int(pl.cdiv(B, 8)) * 8)
    B_pad = int(pl.cdiv(B, TB)) * TB
    if B_pad != B:
        x = jnp.pad(x, ((0, B_pad - B), (0, 0)))

    packed = pl.pallas_call(
        actor_critic_kernel,
        out_shape=jax.ShapeDtypeStruct((B_pad, OUT_COLS), jnp.float32),
        grid=(B_pad // TB,),
        in_specs=[
            pl.BlockSpec((TB, X_PAD), lambda i: (i, 0)),          # x: batch-tiled
            pl.BlockSpec((SLAB_ROWS, HIDDEN), lambda i: (0, 0)),  # slab: resident
        ],
        out_specs=pl.BlockSpec((TB, OUT_COLS), lambda i: (i, 0)),
        compiler_params=pltpu.CompilerParams(
            dimension_semantics=("parallel",),       # second TC on v7x
        ),
    )(x, slab)

    probs = packed[:B, :N_ACTIONS]
    value = packed[:B, N_ACTIONS:N_ACTIONS + 1]
    return probs, value


# ----------------------------------------------------------------------------
# Pure-JAX reference (uses the unpacked params -> also validates the packing).
# ----------------------------------------------------------------------------
def reference_forward(x, p):
    h1 = jnp.tanh((x / 100.0) @ p["w1"] + p["b1"])
    h2 = jnp.tanh(h1 @ p["w2"] + p["b2"])
    logits = h2 @ p["wa"] + p["ba"]
    probs = jax.nn.softmax(logits, axis=-1)
    value = h2 @ p["wc"] + p["bc"]
    return probs, value


if __name__ == "__main__":
    params = init_params(seed=0)
    slab = pack_params(params)

    key = jax.random.PRNGKey(0)
    k1, k2 = jax.random.split(key)

    # Small, multiple-of-8 batch (single grid step).
    B = 64
    x = jax.random.normal(k1, (B, HISTORY_LEN), jnp.float32) * 50.0
    probs, value = actor_critic_forward(x, slab)
    jax.block_until_ready((probs, value))
    ref_probs, ref_value = reference_forward(x, params)
    np.testing.assert_allclose(np.asarray(probs), np.asarray(ref_probs),
                               rtol=1e-5, atol=1e-5)
    np.testing.assert_allclose(np.asarray(value), np.asarray(ref_value),
                               rtol=1e-5, atol=1e-5)
    np.testing.assert_allclose(np.asarray(probs).sum(-1), np.ones(B),
                               rtol=1e-5, atol=1e-5)

    # Ragged batch (not a multiple of 8) exercises the padding path.
    B2 = 50
    x2 = jax.random.normal(k2, (B2, HISTORY_LEN), jnp.float32) * 50.0
    probs2, value2 = actor_critic_forward(x2, slab)
    jax.block_until_ready((probs2, value2))
    ref_probs2, ref_value2 = reference_forward(x2, params)
    np.testing.assert_allclose(np.asarray(probs2), np.asarray(ref_probs2),
                               rtol=1e-5, atol=1e-5)
    np.testing.assert_allclose(np.asarray(value2), np.asarray(ref_value2),
                               rtol=1e-5, atol=1e-5)

    print("KERNEL_OK")
</pallas_src>

<mosaic_0001>
module attributes {stable_mosaic.version = 11 : i64} {
  func.func @actor_critic_kernel(%arg0: i32, %arg1: memref<64x24xf32, #tpu.memory_space<vmem>>, %arg2: memref<160x64xf32, #tpu.memory_space<vmem>>, %arg3: memref<64x8xf32, #tpu.memory_space<vmem>>) attributes {dimension_semantics = [#tpu.dimension_semantics<parallel>], iteration_bounds = array<i64: 1>, scalar_prefetch = 0 : i64, scratch_operands = 0 : i64, tpu.core_type = #tpu.core_type<tc>, window_params = [{transform_indices = @transform_0, window_bounds = array<i64: 64, 24>}, {pipeline_mode = #tpu.pipeline_mode<synchronous>, transform_indices = @transform_1, window_bounds = array<i64: 160, 64>}, {transform_indices = @transform_2, window_bounds = array<i64: 64, 8>}]} {
    %c0 = arith.constant 0 : index
    %c0_0 = arith.constant 0 : index
    %0 = vector.load %arg1[%c0, %c0_0] : memref<64x24xf32, #tpu.memory_space<vmem>>, vector<64x24xf32>
    %c152 = arith.constant 152 : index
    %c0_1 = arith.constant 0 : index
    %1 = vector.load %arg2[%c152, %c0_1] : memref<160x64xf32, #tpu.memory_space<vmem>>, vector<8x64xf32>
    %2 = vector.extract_strided_slice %1 {offsets = [0, 0], sizes = [1, 64], strides = [1, 1]} : vector<8x64xf32> to vector<1x64xf32>
    %3 = vector.extract_strided_slice %1 {offsets = [1, 0], sizes = [1, 64], strides = [1, 1]} : vector<8x64xf32> to vector<1x64xf32>
    %4 = vector.extract_strided_slice %1 {offsets = [2, 0], sizes = [1, 64], strides = [1, 1]} : vector<8x64xf32> to vector<1x64xf32>
    %c0_2 = arith.constant 0 : index
    %c0_3 = arith.constant 0 : index
    %5 = vector.load %arg2[%c0_2, %c0_3] : memref<160x64xf32, #tpu.memory_space<vmem>>, vector<24x64xf32>
    %cst = arith.constant dense<0.000000e+00> : vector<64x64xf32>
    %6 = tpu.matmul %0, %5, %cst {dimension_numbers = #tpu.dot_dimension_numbers<[1], [0], [0], [1], [0, 0, 1, 1], [], []>} : vector<64x24xf32>, vector<24x64xf32>, vector<64x64xf32> -> vector<64x64xf32>
    %7 = vector.broadcast %2 : vector<1x64xf32> to vector<64x64xf32>
    %8 = arith.addf %6, %7 : vector<64x64xf32>
    %9 = math.tanh %8 : vector<64x64xf32>
    %c24 = arith.constant 24 : index
    %c0_4 = arith.constant 0 : index
    %10 = vector.load %arg2[%c24, %c0_4] : memref<160x64xf32, #tpu.memory_space<vmem>>, vector<64x64xf32>
    %cst_5 = arith.constant dense<0.000000e+00> : vector<64x64xf32>
    %11 = tpu.matmul %9, %10, %cst_5 {dimension_numbers = #tpu.dot_dimension_numbers<[1], [0], [0], [1], [0, 0, 1, 1], [], []>} : vector<64x64xf32>, vector<64x64xf32>, vector<64x64xf32> -> vector<64x64xf32>
    %12 = vector.broadcast %3 : vector<1x64xf32> to vector<64x64xf32>
    %13 = arith.addf %11, %12 : vector<64x64xf32>
    %14 = math.tanh %13 : vector<64x64xf32>
    %c88 = arith.constant 88 : index
    %c0_6 = arith.constant 0 : index
    %15 = vector.load %arg2[%c88, %c0_6] : memref<160x64xf32, #tpu.memory_space<vmem>>, vector<64x64xf32>
    %cst_7 = arith.constant dense<0.000000e+00> : vector<64x64xf32>
    %16 = tpu.matmul %14, %15, %cst_7 {dimension_numbers = #tpu.dot_dimension_numbers<[1], [0], [0], [1], [0, 0, 1, 1], [], []>} : vector<64x64xf32>, vector<64x64xf32>, vector<64x64xf32> -> vector<64x64xf32>
    %17 = vector.broadcast %4 : vector<1x64xf32> to vector<64x64xf32>
    %18 = arith.addf %16, %17 : vector<64x64xf32>
    %19 = tpu.iota {dimensions = array<i32: 1>} : vector<64x64xi32>
    %c4_i32 = arith.constant 4 : i32
    %20 = vector.broadcast %c4_i32 : i32 to vector<64x64xi32>
    %21 = arith.cmpi slt, %19, %20 : vector<64x64xi32>
    %cst_8 = arith.constant 0xFF800000 : f32
    %22 = vector.broadcast %cst_8 : f32 to vector<64x64xf32>
    %23 = arith.select %21, %18, %22 : vector<64x64xi1>, vector<64x64xf32>
    %cst_9 = arith.constant dense<0xFF800000> : vector<64xf32>
    %24 = vector.multi_reduction <maximumf>, %23, %cst_9 [1] : vector<64x64xf32> to vector<64xf32>
    %25 = vector.shape_cast %24 : vector<64xf32> to vector<64x1xf32>
    %26 = vector.broadcast %25 : vector<64x1xf32> to vector<64x64xf32>
    %27 = arith.subf %23, %26 : vector<64x64xf32>
    %28 = math.exp %27 : vector<64x64xf32>
    %cst_10 = arith.constant dense<0.000000e+00> : vector<64xf32>
    %29 = vector.multi_reduction <add>, %28, %cst_10 [1] : vector<64x64xf32> to vector<64xf32>
    %30 = vector.shape_cast %29 : vector<64xf32> to vector<64x1xf32>
    %31 = tpu.reciprocal %30 : vector<64x1xf32> -> vector<64x1xf32>
    %32 = vector.broadcast %31 : vector<64x1xf32> to vector<64x64xf32>
    %33 = arith.mulf %28, %32 : vector<64x64xf32>
    %34 = arith.select %21, %33, %18 : vector<64x64xi1>, vector<64x64xf32>
    %35 = vector.extract_strided_slice %34 {offsets = [0, 0], sizes = [64, 8], strides = [1, 1]} : vector<64x64xf32> to vector<64x8xf32>
    %c0_11 = arith.constant 0 : index
    %c0_12 = arith.constant 0 : index
    %36 = vector.load %arg3[%c0_11, %c0_12] : memref<64x8xf32, #tpu.memory_space<vmem>>, vector<64x8xf32>
    tpu.vector_store %arg3[%c0_11, %c0_12], %35 {strides = array<i32>} : memref<64x8xf32, #tpu.memory_space<vmem>>, vector<64x8xf32>,
    return
  }
  func.func @transform_0(%arg0: i32) -> (i32, i32) {
    %c0_i32 = arith.constant 0 : i32
    %c0_i32_0 = arith.constant 0 : i32
    return %arg0, %c0_i32 : i32, i32
  }
  func.func @transform_1(%arg0: i32) -> (i32, i32) {
    %c0_i32 = arith.constant 0 : i32
    %c0_i32_0 = arith.constant 0 : i32
    %c0_i32_1 = arith.constant 0 : i32
    return %c0_i32, %c0_i32_0 : i32, i32
  }
  func.func @transform_2(%arg0: i32) -> (i32, i32) {
    %c0_i32 = arith.constant 0 : i32
    %c0_i32_0 = arith.constant 0 : i32
    return %arg0, %c0_i32 : i32, i32
  }
}

</mosaic_0001>

<llo_original>
// kernel: actor_critic_forward.1
$region0: #{actor_critic_forward.1}
  #allocation0 [shape = 'u32[]', space=smem, size = 0x4, offset = 0x4, fixed_abs, tag = 'smem constant byte address 0x4 - core index']
  #allocation1 [shape = 'u32[144,128]{1,0:T(1,128)}', space=vmem, size = 0x12000, scoped, tag = 'internal scratch']
  %s0 = inlined_call_operand.vmem [shape: f32[64,24], index: 0, kind: input, shape index: {}]
  %s1 = inlined_call_operand.vmem [shape: f32[160,64], index: 1, kind: input, shape index: {}]
  %s2 = inlined_call_operand.vmem [shape: f32[64,8], index: 2, kind: output, shape index: {}]
  %s3 = sld [smem:[#allocation0]]
  $region18: #{actor_critic_forward.1} parent=0
    _
  %s5 = ssub.s32 1, %s3
  %s6 = scalar_select 0, %s5, %s3
  // Predicated region
  $region2: #{actor_critic_forward.1} parent=0 // pred_check
    _
  $region3: #{actor_critic_forward.1} parent=0 // pred_check_branch
    %8 = sbr.rel (0) target = $region5
  $region4: #{actor_critic_forward.1} parent=0 // pred_region
    _
  $region5: #{actor_critic_forward.1} parent=0 // pred_fallthru
    _
  // Predicated region
  $region6: #{actor_critic_forward.1} parent=0 // pred_check
    _
  $region7: #{actor_critic_forward.1} parent=0 // pred_check_branch
    %10 = sbr.rel (0) target = $region9
  $region8: #{actor_critic_forward.1} parent=0 // pred_region
    _
  $region9: #{actor_critic_forward.1} parent=0 // pred_fallthru
    _
  %v11 = vld [vmem:[%s0] sm:$0xff]
  %v12 = vld [vmem:[%s0 + $0x8] sm:$0xff]
  %v13 = vld [vmem:[%s0 + $0x10] sm:$0xff]
  %v14 = vld [vmem:[%s0 + $0x18] sm:$0xff]
  %v15 = vld [vmem:[%s0 + $0x20] sm:$0xff]
  %v16 = vld [vmem:[%s0 + $0x28] sm:$0xff]
  %v17 = vld [vmem:[%s0 + $0x30] sm:$0xff]
  %v18 = vld [vmem:[%s0 + $0x38] sm:$0xff]
  %v19 = vld [vmem:[%s1 + $0x98] sm:$0xff]
  %v20 = vld [vmem:[%s1] sm:$0xff]
  %v21 = vld [vmem:[%s1 + $0x8] sm:$0xff]
  %v22 = vld [vmem:[%s1 + $0x10] sm:$0xff]
  %v23 = vlaneseq
  %v24 = vshrl.u32 %v23, 7
  %v25 = vsub.s32 0, %v24
  %v26 = vrot.slane %v19, %v25
  %vm27 = vcmask 195584
  %v29 = vsel %vm27, %v11, 0
  %v32 = vsel %vm27, %v12, 0
  %v35 = vsel %vm27, %v13, 0
  %v38 = vsel %vm27, %v14, 0
  %v41 = vsel %vm27, %v15, 0
  %v44 = vsel %vm27, %v16, 0
  %v47 = vsel %vm27, %v17, 0
  %v50 = vsel %vm27, %v18, 0
  %52 = vmatprep.subr.mxu0 0.0
  %53 = vmatpush1.msra.mxu0 %v20
  %54 = vmatprep.subr.mxu0 0.0
  %55 = vmatpush1.msra.mxu0 %v21
  %56 = vmatprep.subr.mxu0 0.0
  %57 = vmatpush1.msra.mxu0 %v22
  %58 = vmatprep.subr.mxu0 0.0
  %59 = vmatpush1.msra.mxu0 0.0
  %60 = vmatprep.subr.mxu0 0.0
  %61 = vmatpush1.msra.mxu0 0.0
  %62 = vmatprep.subr.mxu0 0.0
  %63 = vmatpush1.msra.mxu0 0.0
  %64 = vmatprep.subr.mxu0 0.0
  %65 = vmatpush1.msra.mxu0 0.0
  %66 = vmatprep.subr.mxu0 0.0
  %67 = vmatpush1.msra.mxu0 0.0
  %68 = vmatprep.subr.mxu0 0.0
  %69 = vmatpush1.msra.mxu0 0.0
  %70 = vmatprep.subr.mxu0 0.0
  %71 = vmatpush1.msra.mxu0 0.0
  %72 = vmatprep.subr.mxu0 0.0
  %73 = vmatpush1.msra.mxu0 0.0
  %74 = vmatprep.subr.mxu0 0.0
  %75 = vmatpush1.msra.mxu0 0.0
  %76 = vmatprep.subr.mxu0 0.0
  %77 = vmatpush1.msra.mxu0 0.0
  %78 = vmatprep.subr.mxu0 0.0
  %79 = vmatpush1.msra.mxu0 0.0
  %80 = vmatprep.subr.mxu0 0.0
  %81 = vmatpush1.msra.mxu0 0.0
  %82 = vmatprep.subr.mxu0 0.0
  %83 = vmatpush1.msra.mxu0 0.0
  %84 = vmatprep.subr.mxu0 0.0
  %85 = vmatpush1.msra.mxu0 0.0
  %86 = vmatprep.subr.mxu0 0.0
  %87 = vmatpush1.msra.mxu0 0.0
  %88 = vmatprep.subr.mxu0 0.0
  %89 = vmatpush1.msra.mxu0 0.0
  %90 = vmatprep.subr.mxu0 0.0
  %91 = vmatpush1.msra.mxu0 0.0
  %92 = vmatprep.subr.mxu0 0.0
  %93 = vmatpush1.msra.mxu0 0.0
  %94 = vmatprep.subr.mxu0 0.0
  %95 = vmatpush1.msra.mxu0 0.0
  %96 = vmatprep.subr.mxu0 0.0
  %97 = vmatpush1.msra.mxu0 0.0
  %98 = vmatprep.subr.mxu0 0.0
  %99 = vmatpush1.msra.mxu0 0.0
  %100 = vmatprep.subr.mxu0 0.0
  %101 = vmatpush1.msra.mxu0 0.0
  %102 = vmatprep.subr.mxu0 0.0
  %103 = vmatpush1.msra.mxu0 0.0
  %104 = vmatprep.subr.mxu0 0.0
  %105 = vmatpush1.msra.mxu0 0.0
  %106 = vmatprep.subr.mxu0 0.0
  %107 = vmatpush1.msra.mxu0 0.0
  %108 = vmatprep.subr.mxu0 0.0
  %109 = vmatpush1.msra.mxu0 0.0
  %110 = vmatprep.subr.mxu0 0.0
  %111 = vmatpush1.msra.mxu0 0.0
  %112 = vmatprep.subr.mxu0 0.0
  %113 = vmatpush1.msra.mxu0 0.0
  %114 = vmatprep.subr.mxu0 0.0
  %115 = vmatpush1.msra.mxu0 0.0
  %116 = vmatprep.mubr.f32.mxu0 0.0
  %117 = vmatmul.mubr.f32.gmra.mrb[0].mxu0 %v29
  %v118 = vpop.f32.mrb[0].mxu0
  %v119 = vadd.f32 %v26, %v118
  %v120 = vpop.f32.mrb[0].mxu0
  %121 = vmatprep.mubr.f32.mxu0 0.0
  %122 = vmatmul.mubr.f32.gmra.mrb[0].mxu0 %v32
  %v123 = vpop.f32.mrb[0].mxu0
  %v124 = vadd.f32 %v26, %v123
  %v125 = vpop.f32.mrb[0].mxu0
  %126 = vmatprep.mubr.f32.mxu0 0.0
  %127 = vmatmul.mubr.f32.gmra.mrb[0].mxu0 %v35
  %v128 = vpop.f32.mrb[0].mxu0
  %v129 = vadd.f32 %v26, %v128
  %v130 = vpop.f32.mrb[0].mxu0
  %131 = vmatprep.mubr.f32.mxu0 0.0
  %132 = vmatmul.mubr.f32.gmra.mrb[0].mxu0 %v38
  %v133 = vpop.f32.mrb[0].mxu0
  %v134 = vadd.f32 %v26, %v133
  %v135 = vpop.f32.mrb[0].mxu0
  %136 = vmatprep.mubr.f32.mxu0 0.0
  %137 = vmatmul.mubr.f32.gmra.mrb[0].mxu0 %v41
  %v138 = vpop.f32.mrb[0].mxu0
  %v139 = vadd.f32 %v26, %v138
  %v140 = vpop.f32.mrb[0].mxu0
  %141 = vmatprep.mubr.f32.mxu0 0.0
  %142 = vmatmul.mubr.f32.gmra.mrb[0].mxu0 %v44
  %v143 = vpop.f32.mrb[0].mxu0
  %v144 = vadd.f32 %v26, %v143
  %v145 = vpop.f32.mrb[0].mxu0
  %146 = vmatprep.mubr.f32.mxu0 0.0
  %147 = vmatmul.mubr.f32.gmra.mrb[0].mxu0 %v47
  %v148 = vpop.f32.mrb[0].mxu0
  %v149 = vadd.f32 %v26, %v148
  %v150 = vpop.f32.mrb[0].mxu0
  %151 = vmatprep.mubr.f32.mxu0 0.0
  %152 = vmatmul.mubr.f32.gmra.mrb[0].mxu0 %v50
  %v153 = vpop.f32.mrb[0].mxu0
  %v154 = vadd.f32 %v26, %v153
  %v155 = vpop.f32.mrb[0].mxu0
  %156 = vdwg.mxu0
  %v157 = vtanh.pop %v119
  %v158 = vtanh.pop %v124
  %v159 = vtanh.pop %v129
  %v160 = vtanh.pop %v134
  %v161 = vtanh.pop %v139
  %v162 = vtanh.pop %v144
  %v163 = vtanh.pop %v149
  %v164 = vtanh.pop %v154
  %v165 = vld [vmem:[%s1 + $0x18] sm:$0xff]
  %v166 = vld [vmem:[%s1 + $0x20] sm:$0xff]
  %v167 = vld [vmem:[%s1 + $0x28] sm:$0xff]
  %v168 = vld [vmem:[%s1 + $0x30] sm:$0xff]
  %v169 = vld [vmem:[%s1 + $0x38] sm:$0xff]
  %v170 = vld [vmem:[%s1 + $0x40] sm:$0xff]
  %v171 = vld [vmem:[%s1 + $0x48] sm:$0xff]
  %v172 = vld [vmem:[%s1 + $0x50] sm:$0xff]
  %v173 = vlaneseq
  %v174 = vshrl.u32 %v173, 7
  %v175 = vsub.s32 1, %v174
  %v176 = vrot.slane %v19, %v175
  %vm177 = vcmask 523264
  %v179 = vsel %vm177, %v157, 0
  %v182 = vsel %vm177, %v158, 0
  %v185 = vsel %vm177, %v159, 0
  %v188 = vsel %vm177, %v160, 0
  %v191 = vsel %vm177, %v161, 0
  %v194 = vsel %vm177, %v162, 0
  %v197 = vsel %vm177, %v163, 0
  %v200 = vsel %vm177, %v164, 0
  %202 = vmatprep.subr.mxu0 0.0
  %203 = vmatpush1.msra.mxu0 %v165
  %204 = vmatprep.subr.mxu0 0.0
  %205 = vmatpush1.msra.mxu0 %v166
  %206 = vmatprep.subr.mxu0 0.0
  %207 = vmatpush1.msra.mxu0 %v167
  %208 = vmatprep.subr.mxu0 0.0
  %209 = vmatpush1.msra.mxu0 %v168
  %210 = vmatprep.subr.mxu0 0.0
  %211 = vmatpush1.msra.mxu0 %v169
  %212 = vmatprep.subr.mxu0 0.0
  %213 = vmatpush1.msra.mxu0 %v170
  %214 = vmatprep.subr.mxu0 0.0
  %215 = vmatpush1.msra.mxu0 %v171
  %216 = vmatprep.subr.mxu0 0.0
  %217 = vmatpush1.msra.mxu0 %v172
  %218 = vmatprep.subr.mxu0 0.0
  %219 = vmatpush1.msra.mxu0 0.0
  %220 = vmatprep.subr.mxu0 0.0
  %221 = vmatpush1.msra.mxu0 0.0
  %222 = vmatprep.subr.mxu0 0.0
  %223 = vmatpush1.msra.mxu0 0.0
  %224 = vmatprep.subr.mxu0 0.0
  %225 = vmatpush1.msra.mxu0 0.0
  %226 = vmatprep.subr.mxu0 0.0
  %227 = vmatpush1.msra.mxu0 0.0
  %228 = vmatprep.subr.mxu0 0.0
  %229 = vmatpush1.msra.mxu0 0.0
  %230 = vmatprep.subr.mxu0 0.0
  %231 = vmatpush1.msra.mxu0 0.0
  %232 = vmatprep.subr.mxu0 0.0
  %233 = vmatpush1.msra.mxu0 0.0
  %234 = vmatprep.subr.mxu0 0.0
  %235 = vmatpush1.msra.mxu0 0.0
  %236 = vmatprep.subr.mxu0 0.0
  %237 = vmatpush1.msra.mxu0 0.0
  %238 = vmatprep.subr.mxu0 0.0
  %239 = vmatpush1.msra.mxu0 0.0
  %240 = vmatprep.subr.mxu0 0.0
  %241 = vmatpush1.msra.mxu0 0.0
  %242 = vmatprep.subr.mxu0 0.0
  %243 = vmatpush1.msra.mxu0 0.0
  %244 = vmatprep.subr.mxu0 0.0
  %245 = vmatpush1.msra.mxu0 0.0
  %246 = vmatprep.subr.mxu0 0.0
  %247 = vmatpush1.msra.mxu0 0.0
  %248 = vmatprep.subr.mxu0 0.0
  %249 = vmatpush1.msra.mxu0 0.0
  %250 = vmatprep.subr.mxu0 0.0
  %251 = vmatpush1.msra.mxu0 0.0
  %252 = vmatprep.subr.mxu0 0.0
  %253 = vmatpush1.msra.mxu0 0.0
  %254 = vmatprep.subr.mxu0 0.0
  %255 = vmatpush1.msra.mxu0 0.0
  %256 = vmatprep.subr.mxu0 0.0
  %257 = vmatpush1.msra.mxu0 0.0
  %258 = vmatprep.subr.mxu0 0.0
  %259 = vmatpush1.msra.mxu0 0.0
  %260 = vmatprep.subr.mxu0 0.0
  %261 = vmatpush1.msra.mxu0 0.0
  %262 = vmatprep.subr.mxu0 0.0
  %263 = vmatpush1.msra.mxu0 0.0
  %264 = vmatprep.subr.mxu0 0.0
  %265 = vmatpush1.msra.mxu0 0.0
  %266 = vmatprep.mubr.f32.mxu0 0.0
  %267 = vmatmul.mubr.f32.gmra.mrb[0].mxu0 %v179
  %v268 = vpop.f32.mrb[0].mxu0
  %v269 = vadd.f32 %v176, %v268
  %v270 = vpop.f32.mrb[0].mxu0
  %271 = vmatprep.mubr.f32.mxu0 0.0
  %272 = vmatmul.mubr.f32.gmra.mrb[0].mxu0 %v182
  %v273 = vpop.f32.mrb[0].mxu0
  %v274 = vadd.f32 %v176, %v273
  %v275 = vpop.f32.mrb[0].mxu0
  %276 = vmatprep.mubr.f32.mxu0 0.0
  %277 = vmatmul.mubr.f32.gmra.mrb[0].mxu0 %v185
  %v278 = vpop.f32.mrb[0].mxu0
  %v279 = vadd.f32 %v176, %v278
  %v280 = vpop.f32.mrb[0].mxu0
  %281 = vmatprep.mubr.f32.mxu0 0.0
  %282 = vmatmul.mubr.f32.gmra.mrb[0].mxu0 %v188
  %v283 = vpop.f32.mrb[0].mxu0
  %v284 = vadd.f32 %v176, %v283
  %v285 = vpop.f32.mrb[0].mxu0
  %286 = vmatprep.mubr.f32.mxu0 0.0
  %287 = vmatmul.mubr.f32.gmra.mrb[0].mxu0 %v191
  %v288 = vpop.f32.mrb[0].mxu0
  %v289 = vadd.f32 %v176, %v288
  %v290 = vpop.f32.mrb[0].mxu0
  %291 = vmatprep.mubr.f32.mxu0 0.0
  %292 = vmatmul.mubr.f32.gmra.mrb[0].mxu0 %v194
  %v293 = vpop.f32.mrb[0].mxu0
  %v294 = vadd.f32 %v176, %v293
  %v295 = vpop.f32.mrb[0].mxu0
  %296 = vmatprep.mubr.f32.mxu0 0.0
  %297 = vmatmul.mubr.f32.gmra.mrb[0].mxu0 %v197
  %v298 = vpop.f32.mrb[0].mxu0
  %v299 = vadd.f32 %v176, %v298
  %v300 = vpop.f32.mrb[0].mxu0
  %301 = vmatprep.mubr.f32.mxu0 0.0
  %302 = vmatmul.mubr.f32.gmra.mrb[0].mxu0 %v200
  %v303 = vpop.f32.mrb[0].mxu0
  %v304 = vadd.f32 %v176, %v303
  %v305 = vpop.f32.mrb[0].mxu0
  %306 = vdwg.mxu0
  %v307 = vtanh.pop %v269
  %v308 = vtanh.pop %v274
  %v309 = vtanh.pop %v279
  %v310 = vtanh.pop %v284
  %v311 = vtanh.pop %v289
  %v312 = vtanh.pop %v294
  %v313 = vtanh.pop %v299
  %v314 = vtanh.pop %v304
  %v315 = vld [vmem:[%s1 + $0x58] sm:$0xff]
  %v316 = vld [vmem:[%s1 + $0x60] sm:$0xff]
  %v317 = vld [vmem:[%s1 + $0x68] sm:$0xff]
  %v318 = vld [vmem:[%s1 + $0x70] sm:$0xff]
  %v319 = vld [vmem:[%s1 + $0x78] sm:$0xff]
  %v320 = vld [vmem:[%s1 + $0x80] sm:$0xff]
  %v321 = vld [vmem:[%s1 + $0x88] sm:$0xff]
  %v322 = vld [vmem:[%s1 + $0x90] sm:$0xff]
  %v323 = vlaneseq
  %v324 = vshrl.u32 %v323, 7
  %v325 = vsub.s32 2, %v324
  %v326 = vrot.slane %v19, %v325
  %v328 = vsel %vm177, %v307, 0
  %v331 = vsel %vm177, %v308, 0
  %v334 = vsel %vm177, %v309, 0
  %v337 = vsel %vm177, %v310, 0
  %v340 = vsel %vm177, %v311, 0
  %v343 = vsel %vm177, %v312, 0
  %v346 = vsel %vm177, %v313, 0
  %v349 = vsel %vm177, %v314, 0
  %351 = vmatprep.subr.mxu0 0.0
  %352 = vmatpush1.msra.mxu0 %v315
  %353 = vmatprep.subr.mxu0 0.0
  %354 = vmatpush1.msra.mxu0 %v316
  %355 = vmatprep.subr.mxu0 0.0
  %356 = vmatpush1.msra.mxu0 %v317
  %357 = vmatprep.subr.mxu0 0.0
  %358 = vmatpush1.msra.mxu0 %v318
  %359 = vmatprep.subr.mxu0 0.0
  %360 = vmatpush1.msra.mxu0 %v319
  %361 = vmatprep.subr.mxu0 0.0
  %362 = vmatpush1.msra.mxu0 %v320
  %363 = vmatprep.subr.mxu0 0.0
  %364 = vmatpush1.msra.mxu0 %v321
  %365 = vmatprep.subr.mxu0 0.0
  %366 = vmatpush1.msra.mxu0 %v322
  %367 = vmatprep.subr.mxu0 0.0
  %368 = vmatpush1.msra.mxu0 0.0
  %369 = vmatprep.subr.mxu0 0.0
  %370 = vmatpush1.msra.mxu0 0.0
  %371 = vmatprep.subr.mxu0 0.0
  %372 = vmatpush1.msra.mxu0 0.0
  %373 = vmatprep.subr.mxu0 0.0
  %374 = vmatpush1.msra.mxu0 0.0
  %375 = vmatprep.subr.mxu0 0.0
  %376 = vmatpush1.msra.mxu0 0.0
  %377 = vmatprep.subr.mxu0 0.0
  %378 = vmatpush1.msra.mxu0 0.0
  %379 = vmatprep.subr.mxu0 0.0
  %380 = vmatpush1.msra.mxu0 0.0
  %381 = vmatprep.subr.mxu0 0.0
  %382 = vmatpush1.msra.mxu0 0.0
  %383 = vmatprep.subr.mxu0 0.0
  %384 = vmatpush1.msra.mxu0 0.0
  %385 = vmatprep.subr.mxu0 0.0
  %386 = vmatpush1.msra.mxu0 0.0
  %387 = vmatprep.subr.mxu0 0.0
  %388 = vmatpush1.msra.mxu0 0.0
  %389 = vmatprep.subr.mxu0 0.0
  %390 = vmatpush1.msra.mxu0 0.0
  %391 = vmatprep.subr.mxu0 0.0
  %392 = vmatpush1.msra.mxu0 0.0
  %393 = vmatprep.subr.mxu0 0.0
  %394 = vmatpush1.msra.mxu0 0.0
  %395 = vmatprep.subr.mxu0 0.0
  %396 = vmatpush1.msra.mxu0 0.0
  %397 = vmatprep.subr.mxu0 0.0
  %398 = vmatpush1.msra.mxu0 0.0
  %399 = vmatprep.subr.mxu0 0.0
  %400 = vmatpush1.msra.mxu0 0.0
  %401 = vmatprep.subr.mxu0 0.0
  %402 = vmatpush1.msra.mxu0 0.0
  %403 = vmatprep.subr.mxu0 0.0
  %404 = vmatpush1.msra.mxu0 0.0
  %405 = vmatprep.subr.mxu0 0.0
  %406 = vmatpush1.msra.mxu0 0.0
  %407 = vmatprep.subr.mxu0 0.0
  %408 = vmatpush1.msra.mxu0 0.0
  %409 = vmatprep.subr.mxu0 0.0
  %410 = vmatpush1.msra.mxu0 0.0
  %411 = vmatprep.subr.mxu0 0.0
  %412 = vmatpush1.msra.mxu0 0.0
  %413 = vmatprep.subr.mxu0 0.0
  %414 = vmatpush1.msra.mxu0 0.0
  %415 = vmatprep.mubr.f32.mxu0 0.0
  %416 = vmatmul.mubr.f32.gmra.mrb[0].mxu0 %v328
  %v417 = vpop.f32.mrb[0].mxu0
  %v418 = vadd.f32 %v326, %v417
  %v419 = vpop.f32.mrb[0].mxu0
  %420 = vmatprep.mubr.f32.mxu0 0.0
  %421 = vmatmul.mubr.f32.gmra.mrb[0].mxu0 %v331
  %v422 = vpop.f32.mrb[0].mxu0
  %v423 = vadd.f32 %v326, %v422
  %v424 = vpop.f32.mrb[0].mxu0
  %425 = vmatprep.mubr.f32.mxu0 0.0
  %426 = vmatmul.mubr.f32.gmra.mrb[0].mxu0 %v334
  %v427 = vpop.f32.mrb[0].mxu0
  %v428 = vadd.f32 %v326, %v427
  %v429 = vpop.f32.mrb[0].mxu0
  %430 = vmatprep.mubr.f32.mxu0 0.0
  %431 = vmatmul.mubr.f32.gmra.mrb[0].mxu0 %v337
  %v432 = vpop.f32.mrb[0].mxu0
  %v433 = vadd.f32 %v326, %v432
  %v434 = vpop.f32.mrb[0].mxu0
  %435 = vmatprep.mubr.f32.mxu0 0.0
  %436 = vmatmul.mubr.f32.gmra.mrb[0].mxu0 %v340
  %v437 = vpop.f32.mrb[0].mxu0
  %v438 = vadd.f32 %v326, %v437
  %v439 = vpop.f32.mrb[0].mxu0
  %440 = vmatprep.mubr.f32.mxu0 0.0
  %441 = vmatmul.mubr.f32.gmra.mrb[0].mxu0 %v343
  %v442 = vpop.f32.mrb[0].mxu0
  %v443 = vadd.f32 %v326, %v442
  %v444 = vpop.f32.mrb[0].mxu0
  %445 = vmatprep.mubr.f32.mxu0 0.0
  %446 = vmatmul.mubr.f32.gmra.mrb[0].mxu0 %v346
  %v447 = vpop.f32.mrb[0].mxu0
  %v448 = vadd.f32 %v326, %v447
  %v449 = vpop.f32.mrb[0].mxu0
  %450 = vmatprep.mubr.f32.mxu0 0.0
  %451 = vmatmul.mubr.f32.gmra.mrb[0].mxu0 %v349
  %v452 = vpop.f32.mrb[0].mxu0
  %v453 = vadd.f32 %v326, %v452
  %v454 = vpop.f32.mrb[0].mxu0
  %455 = vdwg.mxu0
  %v456 = vlaneseq
  %v457 = vand.u32 %v456, 127
  %vm458 = vcmp.lt.s32.totalorder %v457, 4
  %v459 = vsel %vm458, %v418, -inf
  %v460 = vsel %vm458, %v423, -inf
  %v461 = vsel %vm458, %v428, -inf
  %v462 = vsel %vm458, %v433, -inf
  %v463 = vsel %vm458, %v438, -inf
  %v464 = vsel %vm458, %v443, -inf
  %v465 = vsel %vm458, %v448, -inf
  %v466 = vsel %vm458, %v453, -inf
  %v467 = vsel %vm177, %v459, -inf
  %468 = vmax.xlane.f32.xlu0 %v467
  %v469 = vpop.xlane.xlu0 %468
  %v470 = vsel %vm177, %v460, -inf
  %471 = vmax.xlane.f32.xlu0 %v470
  %v472 = vpop.xlane.xlu0 %471
  %v473 = vsel %vm177, %v461, -inf
  %474 = vmax.xlane.f32.xlu0 %v473
  %v475 = vpop.xlane.xlu0 %474
  %v476 = vsel %vm177, %v462, -inf
  %477 = vmax.xlane.f32.xlu0 %v476
  %v478 = vpop.xlane.xlu0 %477
  %v479 = vsel %vm177, %v463, -inf
  %480 = vmax.xlane.f32.xlu0 %v479
  %v481 = vpop.xlane.xlu0 %480
  %v482 = vsel %vm177, %v464, -inf
  %483 = vmax.xlane.f32.xlu0 %v482
  %v484 = vpop.xlane.xlu0 %483
  %v485 = vsel %vm177, %v465, -inf
  %486 = vmax.xlane.f32.xlu0 %v485
  %v487 = vpop.xlane.xlu0 %486
  %v488 = vsel %vm177, %v466, -inf
  %489 = vmax.xlane.f32.xlu0 %v488
  %v490 = vpop.xlane.xlu0 %489
  %v491 = vsub.f32 %v459, %v469
  %v492 = vsub.f32 %v460, %v472
  %v493 = vsub.f32 %v461, %v475
  %v494 = vsub.f32 %v462, %v478
  %v495 = vsub.f32 %v463, %v481
  %v496 = vsub.f32 %v464, %v484
  %v497 = vsub.f32 %v465, %v487
  %v498 = vsub.f32 %v466, %v490
  %v499 = vmul.f32 %v491, 1.442695
  %v500 = vpow.pop %v499
  %v501 = vmul.f32 %v492, 1.442695
  %v502 = vpow.pop %v501
  %v503 = vmul.f32 %v493, 1.442695
  %v504 = vpow.pop %v503
  %v505 = vmul.f32 %v494, 1.442695
  %v506 = vpow.pop %v505
  %v507 = vmul.f32 %v495, 1.442695
  %v508 = vpow.pop %v507
  %v509 = vmul.f32 %v496, 1.442695
  %v510 = vpow.pop %v509
  %v511 = vmul.f32 %v497, 1.442695
  %v512 = vpow.pop %v511
  %v513 = vmul.f32 %v498, 1.442695
  %v514 = vpow.pop %v513
  %v515 = vsel %vm177, %v500, 0.0
  %516 = vadd.xlane.f32.xlu0 %v515
  %v517 = vpop.xlane.xlu0 %516
  %v518 = vsel %vm177, %v502, 0.0
  %519 = vadd.xlane.f32.xlu0 %v518
  %v520 = vpop.xlane.xlu0 %519
  %v521 = vsel %vm177, %v504, 0.0
  %522 = vadd.xlane.f32.xlu0 %v521
  %v523 = vpop.xlane.xlu0 %522
  %v524 = vsel %vm177, %v506, 0.0
  %525 = vadd.xlane.f32.xlu0 %v524
  %v526 = vpop.xlane.xlu0 %525
  %v527 = vsel %vm177, %v508, 0.0
  %528 = vadd.xlane.f32.xlu0 %v527
  %v529 = vpop.xlane.xlu0 %528
  %v530 = vsel %vm177, %v510, 0.0
  %531 = vadd.xlane.f32.xlu0 %v530
  %v532 = vpop.xlane.xlu0 %531
  %v533 = vsel %vm177, %v512, 0.0
  %534 = vadd.xlane.f32.xlu0 %v533
  %v535 = vpop.xlane.xlu0 %534
  %v536 = vsel %vm177, %v514, 0.0
  %537 = vadd.xlane.f32.xlu0 %v536
  %v538 = vpop.xlane.xlu0 %537
  %v539 = vrcp.pop %v517
  %v540 = vrcp.pop %v520
  %v541 = vrcp.pop %v523
  %v542 = vrcp.pop %v526
  %v543 = vrcp.pop %v529
  %v544 = vrcp.pop %v532
  %v545 = vrcp.pop %v535
  %v546 = vrcp.pop %v538
  %v547 = vmul.f32 %v500, %v539
  %v548 = vmul.f32 %v502, %v540
  %v549 = vmul.f32 %v504, %v541
  %v550 = vmul.f32 %v506, %v542
  %v551 = vmul.f32 %v508, %v543
  %v552 = vmul.f32 %v510, %v544
  %v553 = vmul.f32 %v512, %v545
  %v554 = vmul.f32 %v514, %v546
  %v555 = vsel %vm458, %v547, %v418
  %v556 = vsel %vm458, %v548, %v423
  %v557 = vsel %vm458, %v549, %v428
  %v558 = vsel %vm458, %v550, %v433
  %v559 = vsel %vm458, %v551, %v438
  %v560 = vsel %vm458, %v552, %v443
  %v561 = vsel %vm458, %v553, %v448
  %v562 = vsel %vm458, %v554, %v453
  %vm563 = vcmask 64512
  %564 = vst.msk [vmem:[%s2] sm:$0xff] %vm563, %v555
  %565 = vst.msk [vmem:[%s2 + $0x8] sm:$0xff] %vm563, %v556
  %566 = vst.msk [vmem:[%s2 + $0x10] sm:$0xff] %vm563, %v557
  %567 = vst.msk [vmem:[%s2 + $0x18] sm:$0xff] %vm563, %v558
  %568 = vst.msk [vmem:[%s2 + $0x20] sm:$0xff] %vm563, %v559
  %569 = vst.msk [vmem:[%s2 + $0x28] sm:$0xff] %vm563, %v560
  %570 = vst.msk [vmem:[%s2 + $0x30] sm:$0xff] %vm563, %v561
  %571 = vst.msk [vmem:[%s2 + $0x38] sm:$0xff] %vm563, %v562
  // Predicated region
  $region10: #{actor_critic_forward.1} parent=0 // pred_check
    _
  $region11: #{actor_critic_forward.1} parent=0 // pred_check_branch
    %573 = sbr.rel (0) target = $region13
  $region12: #{actor_critic_forward.1} parent=0 // pred_region
    _
  $region13: #{actor_critic_forward.1} parent=0 // pred_fallthru
    _
  // Predicated region
  $region14: #{actor_critic_forward.1} parent=0 // pred_check
    _
  $region15: #{actor_critic_forward.1} parent=0 // pred_check_branch
    %575 = sbr.rel (0) target = $region17
  $region16: #{actor_critic_forward.1} parent=0 // pred_region
    _
  $region17: #{actor_critic_forward.1} parent=0 // pred_fallthru
    _

</llo_original>
